<compile_context>
chip_gen: v5e
topology: v5e:2x2
jax: 0.10.0
libtpu: 0.0.40
codegen_flags: <defaults>
</compile_context>

<pallas_src>
import jax
import jax.numpy as jnp
from jax import lax
from jax.experimental import pallas as pl
from jax.experimental.pallas import tpu as pltpu


# ----------------------------- Pallas kernel -------------------------------

def _make_afr_kernel(B, L, meta):
    """Build the fused AFR kernel for a static (B, L) and per-block metadata.

    meta: list of dicts {"cp": out-channels, "cr": SE reduced width,
                         "merged": conv1+residual-projection merged}.
    Kernel args: x_ref (B, Cin, L) NCL, then 6 weight refs per block, then
    o_ref (B, Cp_last, L) NCL.
    """
    BL = B * L

    def kernel(*refs):
        x_ref = refs[0]
        o_ref = refs[-1]
        wrefs = refs[1:-1]

        x = x_ref[...]                                   # (B, Cin, L) NCL, f32
        x2d = None                                       # (B*L, C) channels-last rows
        idx = 0
        for bi, m in enumerate(meta):
            cp, cr, merged = m["cp"], m["cr"], m["merged"]
            if merged:
                # wcat = [w1 | w_downsample], bcat = [b1 | b_downsample]
                wcat, bcat, w2, b2, wf1t, wf2 = (r[...] for r in wrefs[idx:idx + 6])
                idx += 6
                if bi == 0:
                    # First block consumes the NCL input directly: per-sample
                    # transposed-LHS matmul (MXU trans_a), rows stacked onto
                    # the sublane axis.  result[l, j] = sum_ci x[b,ci,l]*wcat[ci,j]
                    parts = [
                        lax.dot_general(x[b], wcat, (((0,), (0,)), ((), ())),
                                        preferred_element_type=jnp.float32)
                        for b in range(B)
                    ]
                    h_all = jnp.concatenate(parts, axis=0) + bcat   # (BL, 2*cp)
                else:
                    h_all = jnp.dot(x2d, wcat,
                                    preferred_element_type=jnp.float32) + bcat
                h = jnp.maximum(h_all[:, :cp], 0.0)       # conv1+bn1+relu
                res = h_all[:, cp:]                       # downsample residual
            else:
                w1, b1, w2, b2, wf1t, wf2 = (r[...] for r in wrefs[idx:idx + 6])
                idx += 6
                h = jnp.maximum(
                    jnp.dot(x2d, w1, preferred_element_type=jnp.float32) + b1,
                    0.0)
                res = x2d                                 # identity residual

            # conv2 (k=1) + folded bn2
            h2 = jnp.dot(h, w2, preferred_element_type=jnp.float32) + b2  # (BL, cp)

            # SE: AdaptiveAvgPool1d(1) -> FC -> ReLU -> FC -> Sigmoid.
            # The two FC layers are 1-2 rows wide, so they run on the
            # VPU/XLU/EUP instead of wasting MXU pushes.
            h2_3d = h2.reshape(B, L, cp)
            y = jnp.mean(h2_3d, axis=1)                   # (B, cp) per-sample pool
            s = None
            for j in range(cr):                           # cr = planes // reduction
                zj = jnp.maximum(
                    jnp.sum(y * wf1t[j:j + 1, :], axis=-1, keepdims=True), 0.0)
                term = zj * wf2[j:j + 1, :]               # (B, cp)
                s = term if s is None else s + term
            s = jax.nn.sigmoid(s)                         # (B, cp) excitation
            se = (h2_3d * s[:, None, :]).reshape(BL, cp)  # scale over all L rows

            x2d = jnp.maximum(se + res, 0.0)              # (BL, cp)

        # channels-last rows -> NCL output.  Transpose via the MXU
        # (x2d^T = x2d contracted against an identity) — single cheap push,
        # avoids a standalone XLU relayout.
        eye = (lax.broadcasted_iota(jnp.int32, (BL, BL), 0) ==
               lax.broadcasted_iota(jnp.int32, (BL, BL), 1)).astype(jnp.float32)
        out_t = lax.dot_general(x2d, eye, (((0,), (0,)), ((), ())),
                                preferred_element_type=jnp.float32)  # (cp, BL)
        for b in range(B):
            o_ref[b] = out_t[:, b * L:(b + 1) * L]        # (cp, L) per sample

    return kernel


# ----------------------------- wrapper (glue) -------------------------------

def prepare_afr_weights(params, in_channels):
    """One-time weight prep: merge conv1+downsample, pre-transpose SE fc1."""
    weights, meta = [], []
    cin = in_channels
    for i, p in enumerate(params):
        cp = p["w2"].shape[1]
        cr = p["wf1"].shape[1]
        has_ds = "wd" in p
        merged = has_ds or i == 0           # block 0 consumes NCL input -> always merge
        if merged:
            if has_ds:
                wd, bd = p["wd"], p["bd"]
            else:                           # identity residual projection (cin == cp)
                wd = jnp.eye(cin, cp, dtype=jnp.float32)
                bd = jnp.zeros((1, cp), jnp.float32)
            weights += [jnp.concatenate([p["w1"], wd], axis=1),
                        jnp.concatenate([p["b1"], bd], axis=1)]
        else:
            weights += [p["w1"], p["b1"]]
        weights += [p["w2"], p["b2"], jnp.transpose(p["wf1"]), p["wf2"]]
        meta.append({"cp": cp, "cr": cr, "merged": merged})
        cin = cp
    return weights, meta


def afr_forward(x_ncl, weights, meta):
    """AFR.forward: x (B, 16, L) NCL -> (B, planes*expansion, L) NCL."""
    B, _, L = x_ncl.shape
    cp_last = meta[-1]["cp"]
    kernel = _make_afr_kernel(B, L, meta)
    n_in = 1 + len(weights)
    return pl.pallas_call(
        kernel,
        out_shape=jax.ShapeDtypeStruct((B, cp_last, L), jnp.float32),
        in_specs=[pl.BlockSpec(memory_space=pltpu.MemorySpace.VMEM)] * n_in,
        out_specs=pl.BlockSpec(memory_space=pltpu.MemorySpace.VMEM),
    )(x_ncl, *weights)


# --------------------- deterministic parameter setup ------------------------

def _fold_conv_bn(w, b, gamma, beta, mean, var, eps=1e-5):
    """Fold eval-mode BatchNorm1d into a 1x1 conv.
    w: (Cout, Cin), b: (Cout,) or None -> (Cin, Cout) weight, (1, Cout) bias."""
    scale = gamma / jnp.sqrt(var + eps)
    w_eff = (w * scale[:, None]).T
    b0 = b if b is not None else jnp.zeros_like(gamma)
    b_eff = (b0 - mean) * scale + beta
    return w_eff.astype(jnp.float32), b_eff[None, :].astype(jnp.float32)


def make_afr_params(key, inplanes=16, planes=32, blocks=2, stride=1, reduction=16):
    assert stride == 1  # TODO(synk): strided conv1 (kernel_size=stride) not implemented
    expansion = 1
    params = []
    cin = inplanes
    for i in range(blocks):
        key, *ks = jax.random.split(key, 25)
        cp = planes * expansion
        nrm = lambda k, shp, s=0.2: s * jax.random.normal(k, shp, jnp.float32)
        p = {}

        # conv1: nn.Conv1d(cin, planes, kernel_size=1) + BatchNorm1d(planes)
        p["w1"], p["b1"] = _fold_conv_bn(
            nrm(ks[0], (planes, cin)), nrm(ks[1], (planes,), 0.1),
            1.0 + nrm(ks[2], (planes,), 0.1), nrm(ks[3], (planes,), 0.1),
            nrm(ks[4], (planes,), 0.1),
            1.0 + 0.1 * jnp.abs(jax.random.normal(ks[5], (planes,))))

        # conv2: nn.Conv1d(planes, planes, 1) + BatchNorm1d(planes)
        p["w2"], p["b2"] = _fold_conv_bn(
            nrm(ks[6], (planes, planes)), nrm(ks[7], (planes,), 0.1),
            1.0 + nrm(ks[8], (planes,), 0.1), nrm(ks[9], (planes,), 0.1),
            nrm(ks[10], (planes,), 0.1),
            1.0 + 0.1 * jnp.abs(jax.random.normal(ks[11], (planes,))))

        # SE layer: Linear(planes, planes//r, bias=False), Linear(planes//r, planes, bias=False)
        cr = planes // reduction
        p["wf1"] = nrm(ks[12], (cr, planes)).T       # (planes, cr)
        p["wf2"] = nrm(ks[13], (planes, cr)).T       # (cr, planes)

        # downsample (first block when cin != planes*expansion or stride != 1):
        # Conv1d(cin, cp, 1, bias=False) + BatchNorm1d(cp)
        if stride != 1 or cin != cp:
            p["wd"], p["bd"] = _fold_conv_bn(
                nrm(ks[14], (cp, cin)), None,
                1.0 + nrm(ks[15], (cp,), 0.1), nrm(ks[16], (cp,), 0.1),
                nrm(ks[17], (cp,), 0.1),
                1.0 + 0.1 * jnp.abs(jax.random.normal(ks[18], (cp,))))

        params.append(p)
        cin = cp
    return params


# ------------------------------ pure-JAX ref --------------------------------

def afr_reference(x_ncl, params):
    x = jnp.transpose(x_ncl, (0, 2, 1))
    for p in params:
        h = jnp.maximum(x @ p["w1"] + p["b1"], 0.0)
        h2 = h @ p["w2"] + p["b2"]
        y = jnp.mean(h2, axis=1, keepdims=True)
        y = jnp.maximum(y @ p["wf1"], 0.0)
        y = jax.nn.sigmoid(y @ p["wf2"])
        se = h2 * y
        res = (x @ p["wd"] + p["bd"]) if "wd" in p else x
        x = jnp.maximum(se + res, 0.0)
    return jnp.transpose(x, (0, 2, 1))


# --------------------------------- main --------------------------------------

if __name__ == "__main__":
    B, L = 2, 16
    INPLANES, PLANES, BLOCKS = 16, 32, 2     # AFR fixes inplanes=16

    key = jax.random.PRNGKey(0)
    key, kx, kp = jax.random.split(key, 3)
    x = jax.random.normal(kx, (B, INPLANES, L), jnp.float32)   # PyTorch NCL
    params = make_afr_params(kp, inplanes=INPLANES, planes=PLANES,
                             blocks=BLOCKS, stride=1)

    weights, meta = prepare_afr_weights(params, in_channels=INPLANES)
    out = afr_forward(x, weights, meta)
    out = jax.block_until_ready(out)

    ref = afr_reference(x, params)
    assert out.shape == (B, PLANES, L), out.shape
    assert jnp.allclose(out, ref, rtol=1e-4, atol=1e-4), \
        float(jnp.max(jnp.abs(out - ref)))

    print("KERNEL_OK")
</pallas_src>

<mosaic_0001>
module attributes {stable_mosaic.version = 11 : i64} {
  func.func @kernel(%arg0: memref<2x16x16xf32, #tpu.memory_space<vmem>>, %arg1: memref<16x64xf32, #tpu.memory_space<vmem>>, %arg2: memref<1x64xf32, #tpu.memory_space<vmem>>, %arg3: memref<32x32xf32, #tpu.memory_space<vmem>>, %arg4: memref<1x32xf32, #tpu.memory_space<vmem>>, %arg5: memref<2x32xf32, #tpu.memory_space<vmem>>, %arg6: memref<2x32xf32, #tpu.memory_space<vmem>>, %arg7: memref<32x32xf32, #tpu.memory_space<vmem>>, %arg8: memref<1x32xf32, #tpu.memory_space<vmem>>, %arg9: memref<32x32xf32, #tpu.memory_space<vmem>>, %arg10: memref<1x32xf32, #tpu.memory_space<vmem>>, %arg11: memref<2x32xf32, #tpu.memory_space<vmem>>, %arg12: memref<2x32xf32, #tpu.memory_space<vmem>>, %arg13: memref<2x32x16xf32, #tpu.memory_space<vmem>>) attributes {dimension_semantics = [], scalar_prefetch = 0 : i64, scratch_operands = 0 : i64, tpu.core_type = #tpu.core_type<tc>} {
    %c0 = arith.constant 0 : index
    %c0_0 = arith.constant 0 : index
    %c0_1 = arith.constant 0 : index
    %0 = vector.load %arg0[%c0, %c0_0, %c0_1] : memref<2x16x16xf32, #tpu.memory_space<vmem>>, vector<2x16x16xf32>
    %c0_2 = arith.constant 0 : index
    %c0_3 = arith.constant 0 : index
    %1 = vector.load %arg1[%c0_2, %c0_3] : memref<16x64xf32, #tpu.memory_space<vmem>>, vector<16x64xf32>
    %c0_4 = arith.constant 0 : index
    %c0_5 = arith.constant 0 : index
    %2 = vector.load %arg2[%c0_4, %c0_5] : memref<1x64xf32, #tpu.memory_space<vmem>>, vector<1x64xf32>
    %c0_6 = arith.constant 0 : index
    %c0_7 = arith.constant 0 : index
    %3 = vector.load %arg3[%c0_6, %c0_7] : memref<32x32xf32, #tpu.memory_space<vmem>>, vector<32x32xf32>
    %c0_8 = arith.constant 0 : index
    %c0_9 = arith.constant 0 : index
    %4 = vector.load %arg4[%c0_8, %c0_9] : memref<1x32xf32, #tpu.memory_space<vmem>>, vector<1x32xf32>
    %c0_10 = arith.constant 0 : index
    %c0_11 = arith.constant 0 : index
    %5 = vector.load %arg5[%c0_10, %c0_11] : memref<2x32xf32, #tpu.memory_space<vmem>>, vector<2x32xf32>
    %c0_12 = arith.constant 0 : index
    %c0_13 = arith.constant 0 : index
    %6 = vector.load %arg6[%c0_12, %c0_13] : memref<2x32xf32, #tpu.memory_space<vmem>>, vector<2x32xf32>
    %7 = vector.extract_strided_slice %0 {offsets = [0, 0, 0], sizes = [1, 16, 16], strides = [1, 1, 1]} : vector<2x16x16xf32> to vector<1x16x16xf32>
    %8 = vector.shape_cast %7 : vector<1x16x16xf32> to vector<16x16xf32>
    %cst = arith.constant dense<0.000000e+00> : vector<16x64xf32>
    %9 = tpu.matmul %8, %1, %cst {dimension_numbers = #tpu.dot_dimension_numbers<[0], [0], [1], [1], [0, 1, 1, 1], [], []>} : vector<16x16xf32>, vector<16x64xf32>, vector<16x64xf32> -> vector<16x64xf32>
    %10 = vector.extract_strided_slice %0 {offsets = [1, 0, 0], sizes = [1, 16, 16], strides = [1, 1, 1]} : vector<2x16x16xf32> to vector<1x16x16xf32>
    %11 = vector.shape_cast %10 : vector<1x16x16xf32> to vector<16x16xf32>
    %cst_14 = arith.constant dense<0.000000e+00> : vector<16x64xf32>
    %12 = tpu.matmul %11, %1, %cst_14 {dimension_numbers = #tpu.dot_dimension_numbers<[0], [0], [1], [1], [0, 1, 1, 1], [], []>} : vector<16x16xf32>, vector<16x64xf32>, vector<16x64xf32> -> vector<16x64xf32>
    %13 = tpu.concatenate %9, %12 in 0 : vector<16x64xf32>, vector<16x64xf32> -> vector<32x64xf32>
    %14 = vector.broadcast %2 : vector<1x64xf32> to vector<32x64xf32>
    %15 = arith.addf %13, %14 : vector<32x64xf32>
    %16 = vector.extract_strided_slice %15 {offsets = [0, 0], sizes = [32, 32], strides = [1, 1]} : vector<32x64xf32> to vector<32x32xf32>
    %cst_15 = arith.constant 0.000000e+00 : f32
    %17 = vector.broadcast %cst_15 : f32 to vector<32x32xf32>
    %18 = arith.maximumf %16, %17 : vector<32x32xf32>
    %19 = vector.extract_strided_slice %15 {offsets = [0, 32], sizes = [32, 32], strides = [1, 1]} : vector<32x64xf32> to vector<32x32xf32>
    %cst_16 = arith.constant dense<0.000000e+00> : vector<32x32xf32>
    %20 = tpu.matmul %18, %3, %cst_16 {dimension_numbers = #tpu.dot_dimension_numbers<[1], [0], [0], [1], [0, 0, 1, 1], [], []>} : vector<32x32xf32>, vector<32x32xf32>, vector<32x32xf32> -> vector<32x32xf32>
    %21 = vector.broadcast %4 : vector<1x32xf32> to vector<32x32xf32>
    %22 = arith.addf %20, %21 : vector<32x32xf32>
    %23 = vector.shape_cast %22 : vector<32x32xf32> to vector<2x16x32xf32>
    %cst_17 = arith.constant dense<0.000000e+00> : vector<2x32xf32>
    %24 = vector.multi_reduction <add>, %23, %cst_17 [1] : vector<2x16x32xf32> to vector<2x32xf32>
    %cst_18 = arith.constant 1.600000e+01 : f32
    %25 = vector.broadcast %cst_18 : f32 to vector<2x32xf32>
    %26 = arith.divf %24, %25 : vector<2x32xf32>
    %27 = vector.extract_strided_slice %5 {offsets = [0, 0], sizes = [1, 32], strides = [1, 1]} : vector<2x32xf32> to vector<1x32xf32>
    %28 = vector.broadcast %27 : vector<1x32xf32> to vector<2x32xf32>
    %29 = arith.mulf %26, %28 : vector<2x32xf32>
    %cst_19 = arith.constant dense<0.000000e+00> : vector<2xf32>
    %30 = vector.multi_reduction <add>, %29, %cst_19 [1] : vector<2x32xf32> to vector<2xf32>
    %31 = vector.shape_cast %30 : vector<2xf32> to vector<2x1xf32>
    %cst_20 = arith.constant 0.000000e+00 : f32
    %32 = vector.broadcast %cst_20 : f32 to vector<2x1xf32>
    %33 = arith.maximumf %31, %32 : vector<2x1xf32>
    %34 = vector.extract_strided_slice %6 {offsets = [0, 0], sizes = [1, 32], strides = [1, 1]} : vector<2x32xf32> to vector<1x32xf32>
    %35 = vector.broadcast %33 : vector<2x1xf32> to vector<2x32xf32>
    %36 = vector.broadcast %34 : vector<1x32xf32> to vector<2x32xf32>
    %37 = arith.mulf %35, %36 : vector<2x32xf32>
    %38 = vector.extract_strided_slice %5 {offsets = [1, 0], sizes = [1, 32], strides = [1, 1]} : vector<2x32xf32> to vector<1x32xf32>
    %39 = vector.broadcast %38 : vector<1x32xf32> to vector<2x32xf32>
    %40 = arith.mulf %26, %39 : vector<2x32xf32>
    %cst_21 = arith.constant dense<0.000000e+00> : vector<2xf32>
    %41 = vector.multi_reduction <add>, %40, %cst_21 [1] : vector<2x32xf32> to vector<2xf32>
    %42 = vector.shape_cast %41 : vector<2xf32> to vector<2x1xf32>
    %cst_22 = arith.constant 0.000000e+00 : f32
    %43 = vector.broadcast %cst_22 : f32 to vector<2x1xf32>
    %44 = arith.maximumf %42, %43 : vector<2x1xf32>
    %45 = vector.extract_strided_slice %6 {offsets = [1, 0], sizes = [1, 32], strides = [1, 1]} : vector<2x32xf32> to vector<1x32xf32>
    %46 = vector.broadcast %44 : vector<2x1xf32> to vector<2x32xf32>
    %47 = vector.broadcast %45 : vector<1x32xf32> to vector<2x32xf32>
    %48 = arith.mulf %46, %47 : vector<2x32xf32>
    %49 = arith.addf %37, %48 : vector<2x32xf32>
    %50 = arith.negf %49 : vector<2x32xf32>
    %51 = math.exp %50 : vector<2x32xf32>
    %cst_23 = arith.constant 1.000000e+00 : f32
    %52 = vector.broadcast %cst_23 : f32 to vector<2x32xf32>
    %53 = arith.addf %52, %51 : vector<2x32xf32>
    %54 = arith.divf %52, %53 : vector<2x32xf32>
    %55 = vector.shape_cast %54 : vector<2x32xf32> to vector<2x1x32xf32>
    %56 = vector.broadcast %55 : vector<2x1x32xf32> to vector<2x16x32xf32>
    %57 = arith.mulf %23, %56 : vector<2x16x32xf32>
    %58 = vector.shape_cast %57 : vector<2x16x32xf32> to vector<32x32xf32>
    %59 = arith.addf %58, %19 : vector<32x32xf32>
    %cst_24 = arith.constant 0.000000e+00 : f32
    %60 = vector.broadcast %cst_24 : f32 to vector<32x32xf32>
    %61 = arith.maximumf %59, %60 : vector<32x32xf32>
    %c0_25 = arith.constant 0 : index
    %c0_26 = arith.constant 0 : index
    %62 = vector.load %arg7[%c0_25, %c0_26] : memref<32x32xf32, #tpu.memory_space<vmem>>, vector<32x32xf32>
    %c0_27 = arith.constant 0 : index
    %c0_28 = arith.constant 0 : index
    %63 = vector.load %arg8[%c0_27, %c0_28] : memref<1x32xf32, #tpu.memory_space<vmem>>, vector<1x32xf32>
    %c0_29 = arith.constant 0 : index
    %c0_30 = arith.constant 0 : index
    %64 = vector.load %arg9[%c0_29, %c0_30] : memref<32x32xf32, #tpu.memory_space<vmem>>, vector<32x32xf32>
    %c0_31 = arith.constant 0 : index
    %c0_32 = arith.constant 0 : index
    %65 = vector.load %arg10[%c0_31, %c0_32] : memref<1x32xf32, #tpu.memory_space<vmem>>, vector<1x32xf32>
    %c0_33 = arith.constant 0 : index
    %c0_34 = arith.constant 0 : index
    %66 = vector.load %arg11[%c0_33, %c0_34] : memref<2x32xf32, #tpu.memory_space<vmem>>, vector<2x32xf32>
    %c0_35 = arith.constant 0 : index
    %c0_36 = arith.constant 0 : index
    %67 = vector.load %arg12[%c0_35, %c0_36] : memref<2x32xf32, #tpu.memory_space<vmem>>, vector<2x32xf32>
    %cst_37 = arith.constant dense<0.000000e+00> : vector<32x32xf32>
    %68 = tpu.matmul %61, %62, %cst_37 {dimension_numbers = #tpu.dot_dimension_numbers<[1], [0], [0], [1], [0, 0, 1, 1], [], []>} : vector<32x32xf32>, vector<32x32xf32>, vector<32x32xf32> -> vector<32x32xf32>
    %69 = vector.broadcast %63 : vector<1x32xf32> to vector<32x32xf32>
    %70 = arith.addf %68, %69 : vector<32x32xf32>
    %cst_38 = arith.constant 0.000000e+00 : f32
    %71 = vector.broadcast %cst_38 : f32 to vector<32x32xf32>
    %72 = arith.maximumf %70, %71 : vector<32x32xf32>
    %cst_39 = arith.constant dense<0.000000e+00> : vector<32x32xf32>
    %73 = tpu.matmul %72, %64, %cst_39 {dimension_numbers = #tpu.dot_dimension_numbers<[1], [0], [0], [1], [0, 0, 1, 1], [], []>} : vector<32x32xf32>, vector<32x32xf32>, vector<32x32xf32> -> vector<32x32xf32>
    %74 = vector.broadcast %65 : vector<1x32xf32> to vector<32x32xf32>
    %75 = arith.addf %73, %74 : vector<32x32xf32>
    %76 = vector.shape_cast %75 : vector<32x32xf32> to vector<2x16x32xf32>
    %cst_40 = arith.constant dense<0.000000e+00> : vector<2x32xf32>
    %77 = vector.multi_reduction <add>, %76, %cst_40 [1] : vector<2x16x32xf32> to vector<2x32xf32>
    %cst_41 = arith.constant 1.600000e+01 : f32
    %78 = vector.broadcast %cst_41 : f32 to vector<2x32xf32>
    %79 = arith.divf %77, %78 : vector<2x32xf32>
    %80 = vector.extract_strided_slice %66 {offsets = [0, 0], sizes = [1, 32], strides = [1, 1]} : vector<2x32xf32> to vector<1x32xf32>
    %81 = vector.broadcast %80 : vector<1x32xf32> to vector<2x32xf32>
    %82 = arith.mulf %79, %81 : vector<2x32xf32>
    %cst_42 = arith.constant dense<0.000000e+00> : vector<2xf32>
    %83 = vector.multi_reduction <add>, %82, %cst_42 [1] : vector<2x32xf32> to vector<2xf32>
    %84 = vector.shape_cast %83 : vector<2xf32> to vector<2x1xf32>
    %cst_43 = arith.constant 0.000000e+00 : f32
    %85 = vector.broadcast %cst_43 : f32 to vector<2x1xf32>
    %86 = arith.maximumf %84, %85 : vector<2x1xf32>
    %87 = vector.extract_strided_slice %67 {offsets = [0, 0], sizes = [1, 32], strides = [1, 1]} : vector<2x32xf32> to vector<1x32xf32>
    %88 = vector.broadcast %86 : vector<2x1xf32> to vector<2x32xf32>
    %89 = vector.broadcast %87 : vector<1x32xf32> to vector<2x32xf32>
    %90 = arith.mulf %88, %89 : vector<2x32xf32>
    %91 = vector.extract_strided_slice %66 {offsets = [1, 0], sizes = [1, 32], strides = [1, 1]} : vector<2x32xf32> to vector<1x32xf32>
    %92 = vector.broadcast %91 : vector<1x32xf32> to vector<2x32xf32>
    %93 = arith.mulf %79, %92 : vector<2x32xf32>
    %cst_44 = arith.constant dense<0.000000e+00> : vector<2xf32>
    %94 = vector.multi_reduction <add>, %93, %cst_44 [1] : vector<2x32xf32> to vector<2xf32>
    %95 = vector.shape_cast %94 : vector<2xf32> to vector<2x1xf32>
    %cst_45 = arith.constant 0.000000e+00 : f32
    %96 = vector.broadcast %cst_45 : f32 to vector<2x1xf32>
    %97 = arith.maximumf %95, %96 : vector<2x1xf32>
    %98 = vector.extract_strided_slice %67 {offsets = [1, 0], sizes = [1, 32], strides = [1, 1]} : vector<2x32xf32> to vector<1x32xf32>
    %99 = vector.broadcast %97 : vector<2x1xf32> to vector<2x32xf32>
    %100 = vector.broadcast %98 : vector<1x32xf32> to vector<2x32xf32>
    %101 = arith.mulf %99, %100 : vector<2x32xf32>
    %102 = arith.addf %90, %101 : vector<2x32xf32>
    %103 = arith.negf %102 : vector<2x32xf32>
    %104 = math.exp %103 : vector<2x32xf32>
    %cst_46 = arith.constant 1.000000e+00 : f32
    %105 = vector.broadcast %cst_46 : f32 to vector<2x32xf32>
    %106 = arith.addf %105, %104 : vector<2x32xf32>
    %107 = arith.divf %105, %106 : vector<2x32xf32>
    %108 = vector.shape_cast %107 : vector<2x32xf32> to vector<2x1x32xf32>
    %109 = vector.broadcast %108 : vector<2x1x32xf32> to vector<2x16x32xf32>
    %110 = arith.mulf %76, %109 : vector<2x16x32xf32>
    %111 = vector.shape_cast %110 : vector<2x16x32xf32> to vector<32x32xf32>
    %112 = arith.addf %111, %61 : vector<32x32xf32>
    %cst_47 = arith.constant 0.000000e+00 : f32
    %113 = vector.broadcast %cst_47 : f32 to vector<32x32xf32>
    %114 = arith.maximumf %112, %113 : vector<32x32xf32>
    %115 = tpu.iota {dimensions = array<i32: 0>} : vector<32x32xi32>
    %116 = tpu.iota {dimensions = array<i32: 1>} : vector<32x32xi32>
    %117 = arith.cmpi eq, %115, %116 : vector<32x32xi32>
    %118 = arith.extui %117 : vector<32x32xi1> to vector<32x32xi32>
    %119 = arith.sitofp %118 : vector<32x32xi32> to vector<32x32xf32>
    %cst_48 = arith.constant dense<0.000000e+00> : vector<32x32xf32>
    %120 = tpu.matmul %114, %119, %cst_48 {dimension_numbers = #tpu.dot_dimension_numbers<[0], [0], [1], [1], [0, 1, 1, 1], [], []>} : vector<32x32xf32>, vector<32x32xf32>, vector<32x32xf32> -> vector<32x32xf32>
    %121 = vector.extract_strided_slice %120 {offsets = [0, 0], sizes = [32, 16], strides = [1, 1]} : vector<32x32xf32> to vector<32x16xf32>
    %c0_49 = arith.constant 0 : index
    %c0_50 = arith.constant 0 : index
    %c0_51 = arith.constant 0 : index
    %122 = vector.load %arg13[%c0_49, %c0_50, %c0_51] : memref<2x32x16xf32, #tpu.memory_space<vmem>>, vector<1x32x16xf32>
    %123 = vector.shape_cast %122 : vector<1x32x16xf32> to vector<32x16xf32>
    %124 = vector.shape_cast %121 : vector<32x16xf32> to vector<1x32x16xf32>
    tpu.vector_store %arg13[%c0_49, %c0_50, %c0_51], %124 {strides = array<i32>} : memref<2x32x16xf32, #tpu.memory_space<vmem>>, vector<1x32x16xf32>,
    %125 = vector.extract_strided_slice %120 {offsets = [0, 16], sizes = [32, 16], strides = [1, 1]} : vector<32x32xf32> to vector<32x16xf32>
    %c1 = arith.constant 1 : index
    %c0_52 = arith.constant 0 : index
    %c0_53 = arith.constant 0 : index
    %126 = vector.load %arg13[%c1, %c0_52, %c0_53] : memref<2x32x16xf32, #tpu.memory_space<vmem>>, vector<1x32x16xf32>
    %127 = vector.shape_cast %126 : vector<1x32x16xf32> to vector<32x16xf32>
    %128 = vector.shape_cast %125 : vector<32x16xf32> to vector<1x32x16xf32>
    tpu.vector_store %arg13[%c1, %c0_52, %c0_53], %128 {strides = array<i32>} : memref<2x32x16xf32, #tpu.memory_space<vmem>>, vector<1x32x16xf32>,
    return
  }
}

</mosaic_0001>

<llo_original>
// kernel: tpu_custom_call.1
$region0: #{tpu_custom_call.1}
  #allocation0 [shape = 'u32[]', space=smem, size = 0x4, offset = 0x4, fixed_abs, tag = 'smem constant byte address 0x4 - core index']
  #allocation1 [shape = 'u32[72,128]{1,0:T(1,128)}', space=vmem, size = 0x9000, scoped, tag = 'internal scratch']
  %s0 = inlined_call_operand.hbm [shape: f32[2,16,16], index: 0, kind: input, shape index: {}]
  %s1 = inlined_call_operand.hbm [shape: f32[16,64], index: 1, kind: input, shape index: {}]
  %s2 = inlined_call_operand.hbm [shape: f32[1,64], index: 2, kind: input, shape index: {}]
  %s3 = inlined_call_operand.hbm [shape: f32[32,32], index: 3, kind: input, shape index: {}]
  %s4 = inlined_call_operand.hbm [shape: f32[1,32], index: 4, kind: input, shape index: {}]
  %s5 = inlined_call_operand.vmem [shape: f32[2,32], index: 5, kind: input, shape index: {}]
  %s6 = inlined_call_operand.vmem [shape: f32[2,32], index: 6, kind: input, shape index: {}]
  %s7 = inlined_call_operand.hbm [shape: f32[32,32], index: 7, kind: input, shape index: {}]
  %s8 = inlined_call_operand.hbm [shape: f32[1,32], index: 8, kind: input, shape index: {}]
  %s9 = inlined_call_operand.hbm [shape: f32[32,32], index: 9, kind: input, shape index: {}]
  %s10 = inlined_call_operand.vmem [shape: f32[1,32], index: 10, kind: input, shape index: {}]
  %s11 = inlined_call_operand.vmem [shape: f32[2,32], index: 11, kind: input, shape index: {}]
  %s12 = inlined_call_operand.vmem [shape: f32[2,32], index: 12, kind: input, shape index: {}]
  %s13 = inlined_call_operand.vmem [shape: f32[2,32,16], index: 13, kind: output, shape index: {}]
  %s14 = sld [smem:[#allocation0]]
  $region94: #{tpu_custom_call.1} parent=0
    _
  %s16 = ssub.s32 1, %s14
  %s17 = scalar_select 0, %s16, %s14
  $region1: #{tpu_custom_call.1} parent=0
    #allocation2 [shape = 'u8[16384]{0}', space=vmem, size = 0x4000, scoped, tag = 'input window, operand 0, single buffered']
    #allocation3 [shape = 's32[1]{0}', space=sflag, size = 0x4, scoped, tag = 'scoped memory for tpu_custom_call.1']
    #allocation4 [shape = 'u8[8192]{0}', space=vmem, size = 0x2000, scoped, tag = 'input window, operand 1, single buffered']
    #allocation5 [shape = 's32[1]{0}', space=sflag, size = 0x4, scoped, tag = 'scoped memory for tpu_custom_call.1']
    #allocation6 [shape = 'u8[512]{0}', space=vmem, size = 0x400, scoped, tag = 'input window, operand 2, single buffered']
    #allocation7 [shape = 'u8[16384]{0}', space=vmem, size = 0x4000, scoped, tag = 'input window, operand 3, single buffered']
    #allocation8 [shape = 's32[1]{0}', space=sflag, size = 0x4, scoped, tag = 'scoped memory for tpu_custom_call.1']
    #allocation9 [shape = 'u8[512]{0}', space=vmem, size = 0x400, scoped, tag = 'input window, operand 4, single buffered']
    #allocation10 [shape = 'u8[16384]{0}', space=vmem, size = 0x4000, scoped, tag = 'input window, operand 7, single buffered']
    #allocation11 [shape = 's32[1]{0}', space=sflag, size = 0x4, scoped, tag = 'scoped memory for tpu_custom_call.1']
    #allocation12 [shape = 'u8[512]{0}', space=vmem, size = 0x400, scoped, tag = 'input window, operand 8, single buffered']
    #allocation13 [shape = 'u8[16384]{0}', space=vmem, size = 0x4000, scoped, tag = 'input window, operand 9, single buffered']
    #allocation14 [shape = 's32[1]{0}', space=sflag, size = 0x4, scoped, tag = 'scoped memory for tpu_custom_call.1']
    %18 = vsyncpa [#allocation3], 0
    %19 = vsyncpa [#allocation5], 0
    %20 = vsyncpa [#allocation8], 0
    %21 = vsyncpa [#allocation11], 0
    %22 = vsyncpa [#allocation14], 0
    // Predicated region
    $region2: #{tpu_custom_call.1} parent=1 // pred_check
      _
    $region3: #{tpu_custom_call.1} parent=1 // pred_check_branch
      %24 = sbr.rel (0) target = $region5
    $region4: #{tpu_custom_call.1} parent=1 // pred_region
      %26 = vsyncadd [#allocation3], 0
      %s27 = sshll.u32 %s0, 4
      %s28 = int_to_ptr.hbm [resolvable:$true] %s27
      %s29 = sshll.u32 [#allocation2], 4
      %s30 = int_to_ptr.vmem [resolvable:$true] %s29
      %35 = dma.hbm_to_vmem [thread:$0]  %s28, 512, %s30, [#allocation3], 128, 128, 8
    $region5: #{tpu_custom_call.1} parent=1 // pred_fallthru
      _
    // Predicated region
    $region6: #{tpu_custom_call.1} parent=1 // pred_check
      _
    $region7: #{tpu_custom_call.1} parent=1 // pred_check_branch
      %37 = sbr.rel (0) target = $region9
    $region8: #{tpu_custom_call.1} parent=1 // pred_region
      %39 = vsyncadd [#allocation5], 0
      %s40 = sshll.u32 %s1, 4
      %s41 = int_to_ptr.hbm [resolvable:$true] %s40
      %s42 = sshll.u32 [#allocation4], 4
      %s43 = int_to_ptr.vmem [resolvable:$true] %s42
      %48 = dma.hbm_to_vmem [thread:$0]  %s41, 256, %s43, [#allocation5], 128, 128, 8
    $region9: #{tpu_custom_call.1} parent=1 // pred_fallthru
      _
    // Predicated region
    $region10: #{tpu_custom_call.1} parent=1 // pred_check
      _
    $region11: #{tpu_custom_call.1} parent=1 // pred_check_branch
      %50 = sbr.rel (0) target = $region13
    $region12: #{tpu_custom_call.1} parent=1 // pred_region
      %52 = vsyncadd [#allocation5], 0
      %s54 = sshll.u32 %s2, 4
      %s55 = int_to_ptr.hbm [resolvable:$true] %s54
      %s56 = sshll.u32 [#allocation6], 4
      %s57 = int_to_ptr.vmem [resolvable:$true] %s56
      %59 = dma.hbm_to_vmem [thread:$0]  %s55, 16, %s57, [#allocation5]
    $region13: #{tpu_custom_call.1} parent=1 // pred_fallthru
      _
    // Predicated region
    $region14: #{tpu_custom_call.1} parent=1 // pred_check
      _
    $region15: #{tpu_custom_call.1} parent=1 // pred_check_branch
      %61 = sbr.rel (0) target = $region17
    $region16: #{tpu_custom_call.1} parent=1 // pred_region
      %63 = vsyncadd [#allocation8], 0
      %s64 = sshll.u32 %s3, 4
      %s65 = int_to_ptr.hbm [resolvable:$true] %s64
      %s66 = sshll.u32 [#allocation7], 4
      %s67 = int_to_ptr.vmem [resolvable:$true] %s66
      %72 = dma.hbm_to_vmem [thread:$0]  %s65, 512, %s67, [#allocation8], 128, 128, 8
    $region17: #{tpu_custom_call.1} parent=1 // pred_fallthru
      _
    // Predicated region
    $region18: #{tpu_custom_call.1} parent=1 // pred_check
      _
    $region19: #{tpu_custom_call.1} parent=1 // pred_check_branch
      %74 = sbr.rel (0) target = $region21
    $region20: #{tpu_custom_call.1} parent=1 // pred_region
      %76 = vsyncadd [#allocation8], 0
      %s78 = sshll.u32 %s4, 4
      %s79 = int_to_ptr.hbm [resolvable:$true] %s78
      %s80 = sshll.u32 [#allocation9], 4
      %s81 = int_to_ptr.vmem [resolvable:$true] %s80
      %83 = dma.hbm_to_vmem [thread:$0]  %s79, 16, %s81, [#allocation8]
    $region21: #{tpu_custom_call.1} parent=1 // pred_fallthru
      _
    // Predicated region
    $region22: #{tpu_custom_call.1} parent=1 // pred_check
      _
    $region23: #{tpu_custom_call.1} parent=1 // pred_check_branch
      %85 = sbr.rel (0) target = $region25
    $region24: #{tpu_custom_call.1} parent=1 // pred_region
      _
    $region25: #{tpu_custom_call.1} parent=1 // pred_fallthru
      _
    // Predicated region
    $region26: #{tpu_custom_call.1} parent=1 // pred_check
      _
    $region27: #{tpu_custom_call.1} parent=1 // pred_check_branch
      %87 = sbr.rel (0) target = $region29
    $region28: #{tpu_custom_call.1} parent=1 // pred_region
      _
    $region29: #{tpu_custom_call.1} parent=1 // pred_fallthru
      _
    // Predicated region
    $region30: #{tpu_custom_call.1} parent=1 // pred_check
      _
    $region31: #{tpu_custom_call.1} parent=1 // pred_check_branch
      %89 = sbr.rel (0) target = $region33
    $region32: #{tpu_custom_call.1} parent=1 // pred_region
      %91 = vsyncadd [#allocation11], 0
      %s92 = sshll.u32 %s7, 4
      %s93 = int_to_ptr.hbm [resolvable:$true] %s92
      %s94 = sshll.u32 [#allocation10], 4
      %s95 = int_to_ptr.vmem [resolvable:$true] %s94
      %100 = dma.hbm_to_vmem [thread:$0]  %s93, 512, %s95, [#allocation11], 128, 128, 8
    $region33: #{tpu_custom_call.1} parent=1 // pred_fallthru
      _
    // Predicated region
    $region34: #{tpu_custom_call.1} parent=1 // pred_check
      _
    $region35: #{tpu_custom_call.1} parent=1 // pred_check_branch
      %102 = sbr.rel (0) target = $region37
    $region36: #{tpu_custom_call.1} parent=1 // pred_region
      %104 = vsyncadd [#allocation11], 0
      %s106 = sshll.u32 %s8, 4
      %s107 = int_to_ptr.hbm [resolvable:$true] %s106
      %s108 = sshll.u32 [#allocation12], 4
      %s109 = int_to_ptr.vmem [resolvable:$true] %s108
      %111 = dma.hbm_to_vmem [thread:$0]  %s107, 16, %s109, [#allocation11]
    $region37: #{tpu_custom_call.1} parent=1 // pred_fallthru
      _
    // Predicated region
    $region38: #{tpu_custom_call.1} parent=1 // pred_check
      _
    $region39: #{tpu_custom_call.1} parent=1 // pred_check_branch
      %113 = sbr.rel (0) target = $region41
    $region40: #{tpu_custom_call.1} parent=1 // pred_region
      %115 = vsyncadd [#allocation14], 0
      %s116 = sshll.u32 %s9, 4
      %s117 = int_to_ptr.hbm [resolvable:$true] %s116
      %s118 = sshll.u32 [#allocation13], 4
      %s119 = int_to_ptr.vmem [resolvable:$true] %s118
      %124 = dma.hbm_to_vmem [thread:$0]  %s117, 512, %s119, [#allocation14], 128, 128, 8
    $region41: #{tpu_custom_call.1} parent=1 // pred_fallthru
      _
    // Predicated region
    $region42: #{tpu_custom_call.1} parent=1 // pred_check
      _
    $region43: #{tpu_custom_call.1} parent=1 // pred_check_branch
      %126 = sbr.rel (0) target = $region45
    $region44: #{tpu_custom_call.1} parent=1 // pred_region
      _
    $region45: #{tpu_custom_call.1} parent=1 // pred_fallthru
      _
    // Predicated region
    $region46: #{tpu_custom_call.1} parent=1 // pred_check
      _
    $region47: #{tpu_custom_call.1} parent=1 // pred_check_branch
      %128 = sbr.rel (0) target = $region49
    $region48: #{tpu_custom_call.1} parent=1 // pred_region
      _
    $region49: #{tpu_custom_call.1} parent=1 // pred_fallthru
      _
    // Predicated region
    $region50: #{tpu_custom_call.1} parent=1 // pred_check
      _
    $region51: #{tpu_custom_call.1} parent=1 // pred_check_branch
      %130 = sbr.rel (0) target = $region53
    $region52: #{tpu_custom_call.1} parent=1 // pred_region
      _
    $region53: #{tpu_custom_call.1} parent=1 // pred_fallthru
      _
    // Predicated region
    $region54: #{tpu_custom_call.1} parent=1 // pred_check
      _
    $region55: #{tpu_custom_call.1} parent=1 // pred_check_branch
      %132 = sbr.rel (0) target = $region57
    $region56: #{tpu_custom_call.1} parent=1 // pred_region
      %134 = dma.done [#allocation3], 512
    $region57: #{tpu_custom_call.1} parent=1 // pred_fallthru
      _
    // Predicated region
    $region58: #{tpu_custom_call.1} parent=1 // pred_check
      _
    $region59: #{tpu_custom_call.1} parent=1 // pred_check_branch
      %136 = sbr.rel (0) target = $region61
    $region60: #{tpu_custom_call.1} parent=1 // pred_region
      %138 = dma.done [#allocation5], 256
    $region61: #{tpu_custom_call.1} parent=1 // pred_fallthru
      _
    // Predicated region
    $region62: #{tpu_custom_call.1} parent=1 // pred_check
      _
    $region63: #{tpu_custom_call.1} parent=1 // pred_check_branch
      %140 = sbr.rel (0) target = $region65
    $region64: #{tpu_custom_call.1} parent=1 // pred_region
      %142 = dma.done [#allocation5], 16
    $region65: #{tpu_custom_call.1} parent=1 // pred_fallthru
      _
    // Predicated region
    $region66: #{tpu_custom_call.1} parent=1 // pred_check
      _
    $region67: #{tpu_custom_call.1} parent=1 // pred_check_branch
      %144 = sbr.rel (0) target = $region69
    $region68: #{tpu_custom_call.1} parent=1 // pred_region
      %146 = dma.done [#allocation8], 512
    $region69: #{tpu_custom_call.1} parent=1 // pred_fallthru
      _
    // Predicated region
    $region70: #{tpu_custom_call.1} parent=1 // pred_check
      _
    $region71: #{tpu_custom_call.1} parent=1 // pred_check_branch
      %148 = sbr.rel (0) target = $region73
    $region72: #{tpu_custom_call.1} parent=1 // pred_region
      %150 = dma.done [#allocation8], 16
    $region73: #{tpu_custom_call.1} parent=1 // pred_fallthru
      _
    // Predicated region
    $region74: #{tpu_custom_call.1} parent=1 // pred_check
      _
    $region75: #{tpu_custom_call.1} parent=1 // pred_check_branch
      %152 = sbr.rel (0) target = $region77
    $region76: #{tpu_custom_call.1} parent=1 // pred_region
      %154 = dma.done [#allocation11], 512
    $region77: #{tpu_custom_call.1} parent=1 // pred_fallthru
      _
    // Predicated region
    $region78: #{tpu_custom_call.1} parent=1 // pred_check
      _
    $region79: #{tpu_custom_call.1} parent=1 // pred_check_branch
      %156 = sbr.rel (0) target = $region81
    $region80: #{tpu_custom_call.1} parent=1 // pred_region
      %158 = dma.done [#allocation11], 16
    $region81: #{tpu_custom_call.1} parent=1 // pred_fallthru
      _
    // Predicated region
    $region82: #{tpu_custom_call.1} parent=1 // pred_check
      _
    $region83: #{tpu_custom_call.1} parent=1 // pred_check_branch
      %160 = sbr.rel (0) target = $region85
    $region84: #{tpu_custom_call.1} parent=1 // pred_region
      %162 = dma.done [#allocation14], 512
    $region85: #{tpu_custom_call.1} parent=1 // pred_fallthru
      _
    %v163 = vld [vmem:[#allocation2] sm:$0xff]
    %v164 = vld [vmem:[#allocation2 + $0x8] sm:$0xff]
    %v165 = vld [vmem:[#allocation2 + $0x10] sm:$0xff]
    %v166 = vld [vmem:[#allocation2 + $0x18] sm:$0xff]
    %v167 = vld [vmem:[#allocation4] sm:$0xff]
    %v168 = vld [vmem:[#allocation4 + $0x8] sm:$0xff]
    %v169 = vld [vmem:[#allocation6] sm:$0x1]
    %v170 = vld [vmem:[#allocation7] sm:$0xff]
    %v171 = vld [vmem:[#allocation7 + $0x8] sm:$0xff]
    %v172 = vld [vmem:[#allocation7 + $0x10] sm:$0xff]
    %v173 = vld [vmem:[#allocation7 + $0x18] sm:$0xff]
    %v174 = vld [vmem:[#allocation9] sm:$0x1]
    %v175 = vld [vmem:[%s5] sm:$0x3]
    %v176 = vld [vmem:[%s6] sm:$0x3]
    %177 = vxpose.xlu0.b32.start [1/16] %v163, 128
    %178 = vxpose.xlu0.b32.cont [2/16] %v164, 128
    %179 = vxpose.xlu0.b32.cont [3/16] 0.0, 128
    %180 = vxpose.xlu0.b32.cont [4/16] 0.0, 128
    %181 = vxpose.xlu0.b32.cont [5/16] 0.0, 128
    %182 = vxpose.xlu0.b32.cont [6/16] 0.0, 128
    %183 = vxpose.xlu0.b32.cont [7/16] 0.0, 128
    %184 = vxpose.xlu0.b32.cont [8/16] 0.0, 128
    %185 = vxpose.xlu0.b32.cont [9/16] 0.0, 128
    %186 = vxpose.xlu0.b32.cont [10/16] 0.0, 128
    %187 = vxpose.xlu0.b32.cont [11/16] 0.0, 128
    %188 = vxpose.xlu0.b32.cont [12/16] 0.0, 128
    %189 = vxpose.xlu0.b32.cont [13/16] 0.0, 128
    %190 = vxpose.xlu0.b32.cont [14/16] 0.0, 128
    %191 = vxpose.xlu0.b32.cont [15/16] 0.0, 128
    %192 = vxpose.xlu0.b32.end [16/16] 0.0, 128
    %v193 = vpop.trf.xlu0
    %v194 = vpop.trf.xlu0
    %v195 = vpop.trf.xlu0
    %v196 = vpop.trf.xlu0
    %v197 = vpop.trf.xlu0
    %v198 = vpop.trf.xlu0
    %v199 = vpop.trf.xlu0
    %v200 = vpop.trf.xlu0
    %v201 = vpop.trf.xlu0
    %v202 = vpop.trf.xlu0
    %v203 = vpop.trf.xlu0
    %v204 = vpop.trf.xlu0
    %v205 = vpop.trf.xlu0
    %v206 = vpop.trf.xlu0
    %v207 = vpop.trf.xlu0
    %v208 = vpop.trf.xlu0
    %vm209 = vcmask 130048
    %v211 = vsel %vm209, %v193, 0
    %v214 = vsel %vm209, %v194, 0
    %216 = vmatpush.msra.mxu0 0.0
    %217 = vmatpush.msra.mxu0 0.0
    %218 = vmatpush.msra.mxu0 0.0
    %219 = vmatpush.msra.mxu0 0.0
    %220 = vmatpush.msra.mxu0 0.0
    %221 = vmatpush.msra.mxu0 0.0
    %222 = vmatpush.msra.mxu0 0.0
    %223 = vmatpush.msra.mxu0 0.0
    %224 = vmatpush.msra.mxu0 0.0
    %225 = vmatpush.msra.mxu0 0.0
    %226 = vmatpush.msra.mxu0 0.0
    %227 = vmatpush.msra.mxu0 0.0
    %228 = vmatpush.msra.mxu0 0.0
    %229 = vmatpush.msra.mxu0 0.0
    %230 = vmatpush.msra.mxu0 %v168
    %231 = vmatpush.msra.mxu0 %v167
    %232 = vmatmul.f32.gmra.mxu0 %v211
    %v233 = vpop.f32.mrf.mxu0
    %v234 = vadd.f32 0.0, %v233
    %235 = vmatmul.f32.gmra.mxu0 %v214
    %v236 = vpop.f32.mrf.mxu0
    %v237 = vadd.f32 0.0, %v236
    %238 = vdwg.mxu0
    %239 = vxpose.xlu0.b32.start [1/16] %v165, 128
    %240 = vxpose.xlu0.b32.cont [2/16] %v166, 128
    %241 = vxpose.xlu0.b32.cont [3/16] 0.0, 128
    %242 = vxpose.xlu0.b32.cont [4/16] 0.0, 128
    %243 = vxpose.xlu0.b32.cont [5/16] 0.0, 128
    %244 = vxpose.xlu0.b32.cont [6/16] 0.0, 128
    %245 = vxpose.xlu0.b32.cont [7/16] 0.0, 128
    %246 = vxpose.xlu0.b32.cont [8/16] 0.0, 128
    %247 = vxpose.xlu0.b32.cont [9/16] 0.0, 128
    %248 = vxpose.xlu0.b32.cont [10/16] 0.0, 128
    %249 = vxpose.xlu0.b32.cont [11/16] 0.0, 128
    %250 = vxpose.xlu0.b32.cont [12/16] 0.0, 128
    %251 = vxpose.xlu0.b32.cont [13/16] 0.0, 128
    %252 = vxpose.xlu0.b32.cont [14/16] 0.0, 128
    %253 = vxpose.xlu0.b32.cont [15/16] 0.0, 128
    %254 = vxpose.xlu0.b32.end [16/16] 0.0, 128
    %v255 = vpop.trf.xlu0
    %v256 = vpop.trf.xlu0
    %v257 = vpop.trf.xlu0
    %v258 = vpop.trf.xlu0
    %v259 = vpop.trf.xlu0
    %v260 = vpop.trf.xlu0
    %v261 = vpop.trf.xlu0
    %v262 = vpop.trf.xlu0
    %v263 = vpop.trf.xlu0
    %v264 = vpop.trf.xlu0
    %v265 = vpop.trf.xlu0
    %v266 = vpop.trf.xlu0
    %v267 = vpop.trf.xlu0
    %v268 = vpop.trf.xlu0
    %v269 = vpop.trf.xlu0
    %v270 = vpop.trf.xlu0
    %v272 = vsel %vm209, %v255, 0
    %v275 = vsel %vm209, %v256, 0
    %277 = vmatpush.msra.mxu0 0.0
    %278 = vmatpush.msra.mxu0 0.0
    %279 = vmatpush.msra.mxu0 0.0
    %280 = vmatpush.msra.mxu0 0.0
    %281 = vmatpush.msra.mxu0 0.0
    %282 = vmatpush.msra.mxu0 0.0
    %283 = vmatpush.msra.mxu0 0.0
    %284 = vmatpush.msra.mxu0 0.0
    %285 = vmatpush.msra.mxu0 0.0
    %286 = vmatpush.msra.mxu0 0.0
    %287 = vmatpush.msra.mxu0 0.0
    %288 = vmatpush.msra.mxu0 0.0
    %289 = vmatpush.msra.mxu0 0.0
    %290 = vmatpush.msra.mxu0 0.0
    %291 = vmatpush.msra.mxu0 %v168
    %292 = vmatpush.msra.mxu0 %v167
    %293 = vmatmul.f32.gmra.mxu0 %v272
    %v294 = vpop.f32.mrf.mxu0
    %v295 = vadd.f32 0.0, %v294
    %296 = vmatmul.f32.gmra.mxu0 %v275
    %v297 = vpop.f32.mrf.mxu0
    %v298 = vadd.f32 0.0, %v297
    %299 = vdwg.mxu0
    %v301 = vperm.slane %v169, 0
    %v303 = vadd.f32 %v234, %v301
    %v304 = vadd.f32 %v237, %v301
    %v305 = vadd.f32 %v295, %v301
    %v306 = vadd.f32 %v298, %v301
    %v307 = vmax.f32 %v303, 0.0
    %v308 = vmax.f32 %v304, 0.0
    %v309 = vmax.f32 %v305, 0.0
    %v310 = vmax.f32 %v306, 0.0
    %v312 = vperm.slane %v174, 0
    %vm314 = vcmask 261120
    %v316 = vsel %vm314, %v307, 0
    %v319 = vsel %vm314, %v308, 0
    %v322 = vsel %vm314, %v309, 0
    %v325 = vsel %vm314, %v310, 0
    %327 = vmatpush.msra.mxu0 0.0
    %328 = vmatpush.msra.mxu0 0.0
    %329 = vmatpush.msra.mxu0 0.0
    %330 = vmatpush.msra.mxu0 0.0
    %331 = vmatpush.msra.mxu0 0.0
    %332 = vmatpush.msra.mxu0 0.0
    %333 = vmatpush.msra.mxu0 0.0
    %334 = vmatpush.msra.mxu0 0.0
    %335 = vmatpush.msra.mxu0 0.0
    %336 = vmatpush.msra.mxu0 0.0
    %337 = vmatpush.msra.mxu0 0.0
    %338 = vmatpush.msra.mxu0 0.0
    %339 = vmatpush.msra.mxu0 %v173
    %340 = vmatpush.msra.mxu0 %v172
    %341 = vmatpush.msra.mxu0 %v171
    %342 = vmatpush.msra.mxu0 %v170
    %343 = vmatmul.f32.gmra.mxu0 %v316
    %v344 = vpop.f32.mrf.mxu0
    %v345 = vadd.f32 %v312, %v344
    %346 = vmatmul.f32.gmra.mxu0 %v319
    %v347 = vpop.f32.mrf.mxu0
    %v348 = vadd.f32 %v312, %v347
    %349 = vmatmul.f32.gmra.mxu0 %v322
    %v350 = vpop.f32.mrf.mxu0
    %v351 = vadd.f32 %v312, %v350
    %352 = vmatmul.f32.gmra.mxu0 %v325
    %v353 = vpop.f32.mrf.mxu0
    %v354 = vadd.f32 %v312, %v353
    %355 = vdwg.mxu0
    %v356 = vsel %vm314, %v345, 0.0
    %v357 = vsel %vm314, %v348, 0.0
    %v358 = vadd.f32 %v356, %v357
    %v359 = vrot.slane %v358, 4
    %v360 = vadd.f32 %v358, %v359
    %v361 = vrot.slane %v360, 2
    %v362 = vadd.f32 %v360, %v361
    %v363 = vrot.slane %v362, 1
    %v364 = vadd.f32 %v362, %v363
    %v365 = vsel %vm314, %v351, 0.0
    %v366 = vsel %vm314, %v354, 0.0
    %v367 = vadd.f32 %v365, %v366
    %v368 = vrot.slane %v367, 4
    %v369 = vadd.f32 %v367, %v368
    %v370 = vrot.slane %v369, 2
    %v371 = vadd.f32 %v369, %v370
    %v372 = vrot.slane %v371, 1
    %v373 = vadd.f32 %v371, %v372
    %v374 = vrcp.pop 16.0
    %v375 = vmul.f32 16.0, %v374
    %v376 = vsub.f32 1.0, %v375
    %v377 = vmul.f32 %v374, %v376
    %v378 = vadd.f32 %v374, %v377
    %vm379 = vweird.f32 %v374
    %v380 = vsel %vm379, %v374, %v378
    %v381 = vmul.f32 %v364, %v380
    %v382 = vmul.f32 %v373, %v380
    %v383 = vperm.slane %v175, 0
    %v384 = vmul.f32 %v381, %v383
    %v385 = vmul.f32 %v382, %v383
    %v388 = vrot.slane %v385, 7
    %vm389 = vcmask 1041409
    %v390 = vsel %vm389, %v388, %v384
    %vm392 = vcmask 254976
    %v393 = vsel %vm392, %v390, 0.0
    %394 = vadd.xlane.f32.xlu0 %v393
    %v395 = vpop.xlane.xlu0 %394
    %v396 = vmax.f32 %v395, 0.0
    %v397 = vperm.slane %v176, 0
    %v398 = vmul.f32 %v396, %v397
    %v399 = vperm.slane %v175, 1
    %v400 = vmul.f32 %v381, %v399
    %v401 = vmul.f32 %v382, %v399
    %v404 = vrot.slane %v401, 7
    %v405 = vsel %vm389, %v404, %v400
    %v407 = vsel %vm392, %v405, 0.0
    %408 = vadd.xlane.f32.xlu0 %v407
    %v409 = vpop.xlane.xlu0 %408
    %v410 = vmax.f32 %v409, 0.0
    %v411 = vperm.slane %v176, 1
    %v412 = vmul.f32 %v410, %v411
    %v413 = vadd.f32 %v398, %v412
    %v414 = vxor.u32 %v413, 2147483648
    %v415 = vmul.f32 %v414, 1.442695
    %v416 = vpow.pop %v415
    %v417 = vadd.f32 %v416, 1.0
    %v418 = vrcp.pop %v417
    %v419 = vmul.f32 %v417, %v418
    %v420 = vsub.f32 1.0, %v419
    %v421 = vmul.f32 %v418, %v420
    %v422 = vadd.f32 %v418, %v421
    %vm423 = vweird.f32 %v417
    %vm424 = vweird.f32 %v418
    %vm425 = vmor %vm423, %vm424
    %v426 = vsel %vm425, %v418, %v422
    %v427 = vand.u32 2147483647, %v417
    %vm428 = vcmp.eq.f32.partialorder %v427, 8.507059e+37
    %v429 = vand.u32 %v417, 2147483648
    %v430 = vor.u32 1.1754944e-38, %v429
    %v431 = vsel %vm428, %v430, %v426
    %v432 = vmul.f32 1.0, %v431
    %v434 = vrot.slane %v432, 1
    %v435 = vperm.slane %v432, 0
    %v436 = vperm.slane %v434, 0
    %v439 = vmul.f32 %v345, %v435
    %v440 = vmul.f32 %v348, %v435
    %v441 = vmul.f32 %v351, %v436
    %v442 = vmul.f32 %v354, %v436
    %447 = vrot.lane.b32.xlu0 %v303, 96
    %v448 = vpop.permute.xlu0 %447
    %449 = vrot.lane.b32.xlu0 %v304, 96
    %v450 = vpop.permute.xlu0 %449
    %451 = vrot.lane.b32.xlu0 %v305, 96
    %v452 = vpop.permute.xlu0 %451
    %453 = vrot.lane.b32.xlu0 %v306, 96
    %v454 = vpop.permute.xlu0 %453
    %v459 = vadd.f32 %v439, %v448
    %v460 = vadd.f32 %v440, %v450
    %v461 = vadd.f32 %v441, %v452
    %v462 = vadd.f32 %v442, %v454
    %v463 = vmax.f32 %v459, 0.0
    %v464 = vmax.f32 %v460, 0.0
    %v465 = vmax.f32 %v461, 0.0
    %v466 = vmax.f32 %v462, 0.0
    %v467 = vld [vmem:[#allocation10] sm:$0xff]
    %v468 = vld [vmem:[#allocation10 + $0x8] sm:$0xff]
    %v469 = vld [vmem:[#allocation10 + $0x10] sm:$0xff]
    %v470 = vld [vmem:[#allocation10 + $0x18] sm:$0xff]
    %v471 = vld [vmem:[#allocation12] sm:$0x1]
    %v472 = vld [vmem:[#allocation13] sm:$0xff]
    %v473 = vld [vmem:[#allocation13 + $0x8] sm:$0xff]
    %v474 = vld [vmem:[#allocation13 + $0x10] sm:$0xff]
    %v475 = vld [vmem:[#allocation13 + $0x18] sm:$0xff]
    %v476 = vld [vmem:[%s10] sm:$0x1]
    %v477 = vld [vmem:[%s11] sm:$0x3]
    %v478 = vld [vmem:[%s12] sm:$0x3]
    %v480 = vperm.slane %v471, 0
    %v483 = vsel %vm314, %v463, 0
    %v486 = vsel %vm314, %v464, 0
    %v489 = vsel %vm314, %v465, 0
    %v492 = vsel %vm314, %v466, 0
    %494 = vmatpush.msra.mxu0 0.0
    %495 = vmatpush.msra.mxu0 0.0
    %496 = vmatpush.msra.mxu0 0.0
    %497 = vmatpush.msra.mxu0 0.0
    %498 = vmatpush.msra.mxu0 0.0
    %499 = vmatpush.msra.mxu0 0.0
    %500 = vmatpush.msra.mxu0 0.0
    %501 = vmatpush.msra.mxu0 0.0
    %502 = vmatpush.msra.mxu0 0.0
    %503 = vmatpush.msra.mxu0 0.0
    %504 = vmatpush.msra.mxu0 0.0
    %505 = vmatpush.msra.mxu0 0.0
    %506 = vmatpush.msra.mxu0 %v470
    %507 = vmatpush.msra.mxu0 %v469
    %508 = vmatpush.msra.mxu0 %v468
    %509 = vmatpush.msra.mxu0 %v467
    %510 = vmatmul.f32.gmra.mxu0 %v483
    %v511 = vpop.f32.mrf.mxu0
    %v512 = vadd.f32 %v480, %v511
    %513 = vmatmul.f32.gmra.mxu0 %v486
    %v514 = vpop.f32.mrf.mxu0
    %v515 = vadd.f32 %v480, %v514
    %516 = vmatmul.f32.gmra.mxu0 %v489
    %v517 = vpop.f32.mrf.mxu0
    %v518 = vadd.f32 %v480, %v517
    %519 = vmatmul.f32.gmra.mxu0 %v492
    %v520 = vpop.f32.mrf.mxu0
    %v521 = vadd.f32 %v480, %v520
    %522 = vdwg.mxu0
    %v523 = vmax.f32 %v512, 0.0
    %v524 = vmax.f32 %v515, 0.0
    %v525 = vmax.f32 %v518, 0.0
    %v526 = vmax.f32 %v521, 0.0
    %v528 = vperm.slane %v476, 0
    %v531 = vsel %vm314, %v523, 0
    %v534 = vsel %vm314, %v524, 0
    %v537 = vsel %vm314, %v525, 0
    %v540 = vsel %vm314, %v526, 0
    %542 = vmatpush.msra.mxu0 0.0
    %543 = vmatpush.msra.mxu0 0.0
    %544 = vmatpush.msra.mxu0 0.0
    %545 = vmatpush.msra.mxu0 0.0
    %546 = vmatpush.msra.mxu0 0.0
    %547 = vmatpush.msra.mxu0 0.0
    %548 = vmatpush.msra.mxu0 0.0
    %549 = vmatpush.msra.mxu0 0.0
    %550 = vmatpush.msra.mxu0 0.0
    %551 = vmatpush.msra.mxu0 0.0
    %552 = vmatpush.msra.mxu0 0.0
    %553 = vmatpush.msra.mxu0 0.0
    %554 = vmatpush.msra.mxu0 %v475
    %555 = vmatpush.msra.mxu0 %v474
    %556 = vmatpush.msra.mxu0 %v473
    %557 = vmatpush.msra.mxu0 %v472
    %558 = vmatmul.f32.gmra.mxu0 %v531
    %v559 = vpop.f32.mrf.mxu0
    %v560 = vadd.f32 %v528, %v559
    %561 = vmatmul.f32.gmra.mxu0 %v534
    %v562 = vpop.f32.mrf.mxu0
    %v563 = vadd.f32 %v528, %v562
    %564 = vmatmul.f32.gmra.mxu0 %v537
    %v565 = vpop.f32.mrf.mxu0
    %v566 = vadd.f32 %v528, %v565
    %567 = vmatmul.f32.gmra.mxu0 %v540
    %v568 = vpop.f32.mrf.mxu0
    %v569 = vadd.f32 %v528, %v568
    %570 = vdwg.mxu0
    %v571 = vsel %vm314, %v560, 0.0
    %v572 = vsel %vm314, %v563, 0.0
    %v573 = vadd.f32 %v571, %v572
    %v574 = vrot.slane %v573, 4
    %v575 = vadd.f32 %v573, %v574
    %v576 = vrot.slane %v575, 2
    %v577 = vadd.f32 %v575, %v576
    %v578 = vrot.slane %v577, 1
    %v579 = vadd.f32 %v577, %v578
    %v580 = vsel %vm314, %v566, 0.0
    %v581 = vsel %vm314, %v569, 0.0
    %v582 = vadd.f32 %v580, %v581
    %v583 = vrot.slane %v582, 4
    %v584 = vadd.f32 %v582, %v583
    %v585 = vrot.slane %v584, 2
    %v586 = vadd.f32 %v584, %v585
    %v587 = vrot.slane %v586, 1
    %v588 = vadd.f32 %v586, %v587
    %v589 = vmul.f32 %v579, %v380
    %v590 = vmul.f32 %v588, %v380
    %v591 = vperm.slane %v477, 0
    %v592 = vmul.f32 %v589, %v591
    %v593 = vmul.f32 %v590, %v591
    %v596 = vrot.slane %v593, 7
    %v597 = vsel %vm389, %v596, %v592
    %v599 = vsel %vm392, %v597, 0.0
    %600 = vadd.xlane.f32.xlu0 %v599
    %v601 = vpop.xlane.xlu0 %600
    %v602 = vmax.f32 %v601, 0.0
    %v603 = vperm.slane %v478, 0
    %v604 = vmul.f32 %v602, %v603
    %v605 = vperm.slane %v477, 1
    %v606 = vmul.f32 %v589, %v605
    %v607 = vmul.f32 %v590, %v605
    %v610 = vrot.slane %v607, 7
    %v611 = vsel %vm389, %v610, %v606
    %v613 = vsel %vm392, %v611, 0.0
    %614 = vadd.xlane.f32.xlu0 %v613
    %v615 = vpop.xlane.xlu0 %614
    %v616 = vmax.f32 %v615, 0.0
    %v617 = vperm.slane %v478, 1
    %v618 = vmul.f32 %v616, %v617
    %v619 = vadd.f32 %v604, %v618
    %v620 = vxor.u32 %v619, 2147483648
    %v621 = vmul.f32 %v620, 1.442695
    %v622 = vpow.pop %v621
    %v623 = vadd.f32 %v622, 1.0
    %v624 = vrcp.pop %v623
    %v625 = vmul.f32 %v623, %v624
    %v626 = vsub.f32 1.0, %v625
    %v627 = vmul.f32 %v624, %v626
    %v628 = vadd.f32 %v624, %v627
    %vm629 = vweird.f32 %v623
    %vm630 = vweird.f32 %v624
    %vm631 = vmor %vm629, %vm630
    %v632 = vsel %vm631, %v624, %v628
    %v633 = vand.u32 2147483647, %v623
    %vm634 = vcmp.eq.f32.partialorder %v633, 8.507059e+37
    %v635 = vand.u32 %v623, 2147483648
    %v636 = vor.u32 1.1754944e-38, %v635
    %v637 = vsel %vm634, %v636, %v632
    %v638 = vmul.f32 1.0, %v637
    %v640 = vrot.slane %v638, 1
    %v641 = vperm.slane %v638, 0
    %v642 = vperm.slane %v640, 0
    %v645 = vmul.f32 %v560, %v641
    %v646 = vmul.f32 %v563, %v641
    %v647 = vmul.f32 %v566, %v642
    %v648 = vmul.f32 %v569, %v642
    %v649 = vadd.f32 %v645, %v463
    %v650 = vadd.f32 %v646, %v464
    %v651 = vadd.f32 %v647, %v465
    %v652 = vadd.f32 %v648, %v466
    %v653 = vmax.f32 %v649, 0.0
    %v654 = vmax.f32 %v650, 0.0
    %v655 = vmax.f32 %v651, 0.0
    %v656 = vmax.f32 %v652, 0.0
    %v657 = vlaneseq
    %v658 = vshrl.u32 %v657, 7
    %v659 = vadd.s32 %v658, 8
    %v660 = vadd.s32 %v658, 16
    %v661 = vadd.s32 %v658, 24
    %v662 = vlaneseq
    %v663 = vand.u32 %v662, 127
    %vm664 = vcmp.eq.s32.totalorder %v658, %v663
    %vm665 = vcmp.eq.s32.totalorder %v659, %v663
    %vm666 = vcmp.eq.s32.totalorder %v660, %v663
    %vm667 = vcmp.eq.s32.totalorder %v661, %v663
    %v668 = vsel %vm664, 1, 0
    %v669 = vsel %vm665, 1, 0
    %v670 = vsel %vm666, 1, 0
    %v671 = vsel %vm667, 1, 0
    %v672 = vcvt.s32.f32 %v668
    %v673 = vcvt.s32.f32 %v669
    %v674 = vcvt.s32.f32 %v670
    %v675 = vcvt.s32.f32 %v671
    %676 = vxpose.xlu0.b32.start [1/16] %v653, 128
    %677 = vxpose.xlu0.b32.cont [2/16] %v654, 128
    %678 = vxpose.xlu0.b32.cont [3/16] %v655, 128
    %679 = vxpose.xlu0.b32.cont [4/16] %v656, 128
    %680 = vxpose.xlu0.b32.cont [5/16] 0.0, 128
    %681 = vxpose.xlu0.b32.cont [6/16] 0.0, 128
    %682 = vxpose.xlu0.b32.cont [7/16] 0.0, 128
    %683 = vxpose.xlu0.b32.cont [8/16] 0.0, 128
    %684 = vxpose.xlu0.b32.cont [9/16] 0.0, 128
    %685 = vxpose.xlu0.b32.cont [10/16] 0.0, 128
    %686 = vxpose.xlu0.b32.cont [11/16] 0.0, 128
    %687 = vxpose.xlu0.b32.cont [12/16] 0.0, 128
    %688 = vxpose.xlu0.b32.cont [13/16] 0.0, 128
    %689 = vxpose.xlu0.b32.cont [14/16] 0.0, 128
    %690 = vxpose.xlu0.b32.cont [15/16] 0.0, 128
    %691 = vxpose.xlu0.b32.end [16/16] 0.0, 128
    %v692 = vpop.trf.xlu0
    %v693 = vpop.trf.xlu0
    %v694 = vpop.trf.xlu0
    %v695 = vpop.trf.xlu0
    %v696 = vpop.trf.xlu0
    %v697 = vpop.trf.xlu0
    %v698 = vpop.trf.xlu0
    %v699 = vpop.trf.xlu0
    %v700 = vpop.trf.xlu0
    %v701 = vpop.trf.xlu0
    %v702 = vpop.trf.xlu0
    %v703 = vpop.trf.xlu0
    %v704 = vpop.trf.xlu0
    %v705 = vpop.trf.xlu0
    %v706 = vpop.trf.xlu0
    %v707 = vpop.trf.xlu0
    %v709 = vsel %vm314, %v692, 0
    %v712 = vsel %vm314, %v693, 0
    %v715 = vsel %vm314, %v694, 0
    %v718 = vsel %vm314, %v695, 0
    %720 = vmatpush.msra.mxu0 0.0
    %721 = vmatpush.msra.mxu0 0.0
    %722 = vmatpush.msra.mxu0 0.0
    %723 = vmatpush.msra.mxu0 0.0
    %724 = vmatpush.msra.mxu0 0.0
    %725 = vmatpush.msra.mxu0 0.0
    %726 = vmatpush.msra.mxu0 0.0
    %727 = vmatpush.msra.mxu0 0.0
    %728 = vmatpush.msra.mxu0 0.0
    %729 = vmatpush.msra.mxu0 0.0
    %730 = vmatpush.msra.mxu0 0.0
    %731 = vmatpush.msra.mxu0 0.0
    %732 = vmatpush.msra.mxu0 %v675
    %733 = vmatpush.msra.mxu0 %v674
    %734 = vmatpush.msra.mxu0 %v673
    %735 = vmatpush.msra.mxu0 %v672
    %736 = vmatmul.f32.gmra.mxu0 %v709
    %v737 = vpop.f32.mrf.mxu0
    %v738 = vadd.f32 0.0, %v737
    %739 = vmatmul.f32.gmra.mxu0 %v712
    %v740 = vpop.f32.mrf.mxu0
    %v741 = vadd.f32 0.0, %v740
    %742 = vmatmul.f32.gmra.mxu0 %v715
    %v743 = vpop.f32.mrf.mxu0
    %v744 = vadd.f32 0.0, %v743
    %745 = vmatmul.f32.gmra.mxu0 %v718
    %v746 = vpop.f32.mrf.mxu0
    %v747 = vadd.f32 0.0, %v746
    %748 = vdwg.mxu0
    %749 = vst.msk [vmem:[%s13] sm:$0xff] %vm209, %v738
    %750 = vst.msk [vmem:[%s13 + $0x8] sm:$0xff] %vm209, %v741
    %751 = vst.msk [vmem:[%s13 + $0x10] sm:$0xff] %vm209, %v744
    %752 = vst.msk [vmem:[%s13 + $0x18] sm:$0xff] %vm209, %v747
    %757 = vrot.lane.b32.xlu0 %v738, 112
    %v758 = vpop.permute.xlu0 %757
    %759 = vrot.lane.b32.xlu0 %v741, 112
    %v760 = vpop.permute.xlu0 %759
    %761 = vrot.lane.b32.xlu0 %v744, 112
    %v762 = vpop.permute.xlu0 %761
    %763 = vrot.lane.b32.xlu0 %v747, 112
    %v764 = vpop.permute.xlu0 %763
    %s769 = scalar_lea.vmem %s13, 32
    %770 = vst.msk [vmem:[%s769] sm:$0xff] %vm209, %v758
    %771 = vst.msk [vmem:[%s769 + $0x8] sm:$0xff] %vm209, %v760
    %772 = vst.msk [vmem:[%s769 + $0x10] sm:$0xff] %vm209, %v762
    %773 = vst.msk [vmem:[%s769 + $0x18] sm:$0xff] %vm209, %v764
    // Predicated region
    $region86: #{tpu_custom_call.1} parent=1 // pred_check
      _
    $region87: #{tpu_custom_call.1} parent=1 // pred_check_branch
      %775 = sbr.rel (0) target = $region89
    $region88: #{tpu_custom_call.1} parent=1 // pred_region
      _
    $region89: #{tpu_custom_call.1} parent=1 // pred_fallthru
      _
    // Predicated region
    $region90: #{tpu_custom_call.1} parent=1 // pred_check
      _
    $region91: #{tpu_custom_call.1} parent=1 // pred_check_branch
      %777 = sbr.rel (0) target = $region93
    $region92: #{tpu_custom_call.1} parent=1 // pred_region
      _
    $region93: #{tpu_custom_call.1} parent=1 // pred_fallthru
      _
    %778 = vsyncpa [#allocation3], 1
    %779 = vsyncpa [#allocation5], 1
    %780 = vsyncpa [#allocation8], 1
    %781 = vsyncpa [#allocation11], 1
    %782 = vsyncpa [#allocation14], 1

</llo_original>
